<compile_context>
chip_gen: v6e
topology: v6e:2x2x1
jax: 0.10.0
libtpu: 0.0.40
codegen_flags: <defaults>
</compile_context>

<pallas_src>
import math

import jax
import jax.numpy as jnp
from jax.experimental import pallas as pl
from jax.experimental.pallas import tpu as pltpu


def _make_linear_t_kernel(out_f: int, in_f: int):
    """Builds a kernel computing y^T = W @ x^T + b on a lane-dense block.

    w_ref : (out_f * in_f,) f32 in SMEM, row-major (w[j, k] at j*in_f + k).
    b_ref : (out_f,)        f32 in SMEM.
    xt_ref: (in_f, tn)      input block, N on lanes.
    yt_ref: (out_f, tn)     output block, N on lanes.
    """

    def kernel(w_ref, b_ref, xt_ref, yt_ref):
        # Load each input row once as a lane-dense (1, tn) slab; f32 compute.
        rows = [xt_ref[k:k + 1, :].astype(jnp.float32) for k in range(in_f)]
        for j in range(out_f):                 # out_f*in_f unrolled VPU FMAs
            acc = rows[0] * w_ref[j * in_f] + b_ref[j]
            for k in range(1, in_f):
                acc = acc + rows[k] * w_ref[j * in_f + k]
            yt_ref[j:j + 1, :] = acc.astype(yt_ref.dtype)

    return kernel


def linear_functional(x: jax.Array, w: jax.Array, b: jax.Array,
                      *, tn: int = 32768) -> jax.Array:
    """Pallas equivalent of torch.nn.functional.linear(x, w, b).

    x: (..., in_features), w: (out_features, in_features), b: (out_features,).
    Returns x @ w.T + b with shape (..., out_features).
    """
    *lead, in_f = x.shape
    out_f, in_f_w = w.shape
    assert in_f == in_f_w, "in_features mismatch"
    assert b.shape == (out_f,), "bias shape mismatch"

    n = math.prod(lead) if lead else 1
    # Lane-dense presentation: the long N axis goes on lanes (last dim).
    # The transpose each way is wrapper-side layout plumbing only.
    xt = x.reshape(n, in_f).T                        # (in_f, n)
    w_flat = w.reshape(-1).astype(jnp.float32)       # SMEM scalar table
    b_f = b.astype(jnp.float32)

    kernel = _make_linear_t_kernel(out_f, in_f)
    smem = pl.BlockSpec(memory_space=pltpu.MemorySpace.SMEM)
    out_shape = jax.ShapeDtypeStruct((out_f, n), x.dtype)

    if n <= tn:
        # Single-block, gridless call: whole x^T / y^T resident in VMEM,
        # w / b in SMEM.  (For demo-sized N the pallas_call launch overhead
        # dominates anyway; this path exists for correctness/parity.)
        yt = pl.pallas_call(
            kernel,
            out_shape=out_shape,
            in_specs=[smem, smem,
                      pl.BlockSpec(memory_space=pltpu.MemorySpace.VMEM)],
            out_specs=pl.BlockSpec(memory_space=pltpu.MemorySpace.VMEM),
        )(w_flat, b_f, xt)
    else:
        # General path: tile only N (lanes), ragged tail masked by Pallas
        # (no pad of x, no slice of the output).
        itemsize = jnp.dtype(x.dtype).itemsize
        yt = pl.pallas_call(
            kernel,
            out_shape=out_shape,
            grid_spec=pltpu.PrefetchScalarGridSpec(
                num_scalar_prefetch=0,
                grid=(pl.cdiv(n, tn),),
                in_specs=[
                    smem,                                        # w scalars
                    smem,                                        # b scalars
                    pl.BlockSpec((in_f, tn), lambda i: (0, i)),  # x^T tile
                ],
                out_specs=pl.BlockSpec((out_f, tn), lambda i: (0, i)),
            ),
            compiler_params=pltpu.CompilerParams(
                dimension_semantics=("parallel",),  # feeds both v7x TCs
            ),
            cost_estimate=pl.CostEstimate(
                flops=2 * n * in_f * out_f,
                transcendentals=0,
                bytes_accessed=n * (in_f + out_f) * itemsize,
            ),
        )(w_flat, b_f, xt)

    return yt.T.reshape(*lead, out_f)


def _kaiming_uniform(key, shape, a=math.sqrt(5)):
    # Matches torch.nn.init.kaiming_uniform_ for a 2-D weight (fan_in = shape[1]).
    fan_in = shape[1]
    gain = math.sqrt(2.0 / (1.0 + a * a))
    bound = gain * math.sqrt(3.0 / fan_in)
    return jax.random.uniform(key, shape, minval=-bound, maxval=bound,
                              dtype=jnp.float32)


if __name__ == "__main__":
    key = jax.random.PRNGKey(0)
    k_w, k_x, k_x2 = jax.random.split(key, 3)

    # Parameters (deterministic, mirroring the module's __init__).
    w1 = _kaiming_uniform(k_w, (4, 4))          # nn.Parameter(torch.empty(4, 4))
    b1 = jnp.zeros((4,), dtype=jnp.float32)     # nn.Parameter(torch.zeros(4))

    # Small input consistent with the module: batch=8, in_features=4.
    x = jax.random.normal(k_x, (8, 4), dtype=jnp.float32)
    out = jax.block_until_ready(linear_functional(x, w1, b1))
    ref = x @ w1.T + b1
    assert out.shape == (8, 4)
    assert jnp.allclose(out, ref, atol=1e-5, rtol=1e-5)

    # Also exercise the tiled grid path (including a ragged last block) with a
    # small tile override so the check stays cheap.
    x_big = jax.random.normal(k_x2, (1000, 4), dtype=jnp.float32)
    out_big = jax.block_until_ready(linear_functional(x_big, w1, b1, tn=256))
    ref_big = x_big @ w1.T + b1
    assert out_big.shape == (1000, 4)
    assert jnp.allclose(out_big, ref_big, atol=1e-5, rtol=1e-5)

    print("KERNEL_OK")
</pallas_src>

<mosaic_0001>
module attributes {stable_mosaic.version = 11 : i64} {
  func.func @kernel(%arg0: memref<16xf32, #tpu.memory_space<smem>>, %arg1: memref<4xf32, #tpu.memory_space<smem>>, %arg2: memref<4x8xf32, #tpu.memory_space<vmem>>, %arg3: memref<4x8xf32, #tpu.memory_space<vmem>>) attributes {dimension_semantics = [], scalar_prefetch = 0 : i64, scratch_operands = 0 : i64, tpu.core_type = #tpu.core_type<tc>} {
    %c0 = arith.constant 0 : index
    %c0_0 = arith.constant 0 : index
    %0 = vector.load %arg2[%c0, %c0_0] : memref<4x8xf32, #tpu.memory_space<vmem>>, vector<1x8xf32>
    %c1 = arith.constant 1 : index
    %c0_1 = arith.constant 0 : index
    %1 = vector.load %arg2[%c1, %c0_1] : memref<4x8xf32, #tpu.memory_space<vmem>>, vector<1x8xf32>
    %c2 = arith.constant 2 : index
    %c0_2 = arith.constant 0 : index
    %2 = vector.load %arg2[%c2, %c0_2] : memref<4x8xf32, #tpu.memory_space<vmem>>, vector<1x8xf32>
    %c3 = arith.constant 3 : index
    %c0_3 = arith.constant 0 : index
    %3 = vector.load %arg2[%c3, %c0_3] : memref<4x8xf32, #tpu.memory_space<vmem>>, vector<1x8xf32>
    %c0_4 = arith.constant 0 : index
    %4 = memref.load %arg0[%c0_4] : memref<16xf32, #tpu.memory_space<smem>>
    %5 = vector.broadcast %4 : f32 to vector<1x8xf32>
    %6 = arith.mulf %0, %5 : vector<1x8xf32>
    %c0_5 = arith.constant 0 : index
    %7 = memref.load %arg1[%c0_5] : memref<4xf32, #tpu.memory_space<smem>>
    %8 = vector.broadcast %7 : f32 to vector<1x8xf32>
    %9 = arith.addf %6, %8 : vector<1x8xf32>
    %c1_6 = arith.constant 1 : index
    %10 = memref.load %arg0[%c1_6] : memref<16xf32, #tpu.memory_space<smem>>
    %11 = vector.broadcast %10 : f32 to vector<1x8xf32>
    %12 = arith.mulf %1, %11 : vector<1x8xf32>
    %13 = arith.addf %9, %12 : vector<1x8xf32>
    %c2_7 = arith.constant 2 : index
    %14 = memref.load %arg0[%c2_7] : memref<16xf32, #tpu.memory_space<smem>>
    %15 = vector.broadcast %14 : f32 to vector<1x8xf32>
    %16 = arith.mulf %2, %15 : vector<1x8xf32>
    %17 = arith.addf %13, %16 : vector<1x8xf32>
    %c3_8 = arith.constant 3 : index
    %18 = memref.load %arg0[%c3_8] : memref<16xf32, #tpu.memory_space<smem>>
    %19 = vector.broadcast %18 : f32 to vector<1x8xf32>
    %20 = arith.mulf %3, %19 : vector<1x8xf32>
    %21 = arith.addf %17, %20 : vector<1x8xf32>
    %c0_9 = arith.constant 0 : index
    %c0_10 = arith.constant 0 : index
    %22 = vector.load %arg3[%c0_9, %c0_10] : memref<4x8xf32, #tpu.memory_space<vmem>>, vector<1x8xf32>
    tpu.vector_store %arg3[%c0_9, %c0_10], %21 {strides = array<i32>} : memref<4x8xf32, #tpu.memory_space<vmem>>, vector<1x8xf32>,
    %c4 = arith.constant 4 : index
    %23 = memref.load %arg0[%c4] : memref<16xf32, #tpu.memory_space<smem>>
    %24 = vector.broadcast %23 : f32 to vector<1x8xf32>
    %25 = arith.mulf %0, %24 : vector<1x8xf32>
    %c1_11 = arith.constant 1 : index
    %26 = memref.load %arg1[%c1_11] : memref<4xf32, #tpu.memory_space<smem>>
    %27 = vector.broadcast %26 : f32 to vector<1x8xf32>
    %28 = arith.addf %25, %27 : vector<1x8xf32>
    %c5 = arith.constant 5 : index
    %29 = memref.load %arg0[%c5] : memref<16xf32, #tpu.memory_space<smem>>
    %30 = vector.broadcast %29 : f32 to vector<1x8xf32>
    %31 = arith.mulf %1, %30 : vector<1x8xf32>
    %32 = arith.addf %28, %31 : vector<1x8xf32>
    %c6 = arith.constant 6 : index
    %33 = memref.load %arg0[%c6] : memref<16xf32, #tpu.memory_space<smem>>
    %34 = vector.broadcast %33 : f32 to vector<1x8xf32>
    %35 = arith.mulf %2, %34 : vector<1x8xf32>
    %36 = arith.addf %32, %35 : vector<1x8xf32>
    %c7 = arith.constant 7 : index
    %37 = memref.load %arg0[%c7] : memref<16xf32, #tpu.memory_space<smem>>
    %38 = vector.broadcast %37 : f32 to vector<1x8xf32>
    %39 = arith.mulf %3, %38 : vector<1x8xf32>
    %40 = arith.addf %36, %39 : vector<1x8xf32>
    %c1_12 = arith.constant 1 : index
    %c0_13 = arith.constant 0 : index
    %41 = vector.load %arg3[%c1_12, %c0_13] : memref<4x8xf32, #tpu.memory_space<vmem>>, vector<1x8xf32>
    tpu.vector_store %arg3[%c1_12, %c0_13], %40 {strides = array<i32>} : memref<4x8xf32, #tpu.memory_space<vmem>>, vector<1x8xf32>,
    %c8 = arith.constant 8 : index
    %42 = memref.load %arg0[%c8] : memref<16xf32, #tpu.memory_space<smem>>
    %43 = vector.broadcast %42 : f32 to vector<1x8xf32>
    %44 = arith.mulf %0, %43 : vector<1x8xf32>
    %c2_14 = arith.constant 2 : index
    %45 = memref.load %arg1[%c2_14] : memref<4xf32, #tpu.memory_space<smem>>
    %46 = vector.broadcast %45 : f32 to vector<1x8xf32>
    %47 = arith.addf %44, %46 : vector<1x8xf32>
    %c9 = arith.constant 9 : index
    %48 = memref.load %arg0[%c9] : memref<16xf32, #tpu.memory_space<smem>>
    %49 = vector.broadcast %48 : f32 to vector<1x8xf32>
    %50 = arith.mulf %1, %49 : vector<1x8xf32>
    %51 = arith.addf %47, %50 : vector<1x8xf32>
    %c10 = arith.constant 10 : index
    %52 = memref.load %arg0[%c10] : memref<16xf32, #tpu.memory_space<smem>>
    %53 = vector.broadcast %52 : f32 to vector<1x8xf32>
    %54 = arith.mulf %2, %53 : vector<1x8xf32>
    %55 = arith.addf %51, %54 : vector<1x8xf32>
    %c11 = arith.constant 11 : index
    %56 = memref.load %arg0[%c11] : memref<16xf32, #tpu.memory_space<smem>>
    %57 = vector.broadcast %56 : f32 to vector<1x8xf32>
    %58 = arith.mulf %3, %57 : vector<1x8xf32>
    %59 = arith.addf %55, %58 : vector<1x8xf32>
    %c2_15 = arith.constant 2 : index
    %c0_16 = arith.constant 0 : index
    %60 = vector.load %arg3[%c2_15, %c0_16] : memref<4x8xf32, #tpu.memory_space<vmem>>, vector<1x8xf32>
    tpu.vector_store %arg3[%c2_15, %c0_16], %59 {strides = array<i32>} : memref<4x8xf32, #tpu.memory_space<vmem>>, vector<1x8xf32>,
    %c12 = arith.constant 12 : index
    %61 = memref.load %arg0[%c12] : memref<16xf32, #tpu.memory_space<smem>>
    %62 = vector.broadcast %61 : f32 to vector<1x8xf32>
    %63 = arith.mulf %0, %62 : vector<1x8xf32>
    %c3_17 = arith.constant 3 : index
    %64 = memref.load %arg1[%c3_17] : memref<4xf32, #tpu.memory_space<smem>>
    %65 = vector.broadcast %64 : f32 to vector<1x8xf32>
    %66 = arith.addf %63, %65 : vector<1x8xf32>
    %c13 = arith.constant 13 : index
    %67 = memref.load %arg0[%c13] : memref<16xf32, #tpu.memory_space<smem>>
    %68 = vector.broadcast %67 : f32 to vector<1x8xf32>
    %69 = arith.mulf %1, %68 : vector<1x8xf32>
    %70 = arith.addf %66, %69 : vector<1x8xf32>
    %c14 = arith.constant 14 : index
    %71 = memref.load %arg0[%c14] : memref<16xf32, #tpu.memory_space<smem>>
    %72 = vector.broadcast %71 : f32 to vector<1x8xf32>
    %73 = arith.mulf %2, %72 : vector<1x8xf32>
    %74 = arith.addf %70, %73 : vector<1x8xf32>
    %c15 = arith.constant 15 : index
    %75 = memref.load %arg0[%c15] : memref<16xf32, #tpu.memory_space<smem>>
    %76 = vector.broadcast %75 : f32 to vector<1x8xf32>
    %77 = arith.mulf %3, %76 : vector<1x8xf32>
    %78 = arith.addf %74, %77 : vector<1x8xf32>
    %c3_18 = arith.constant 3 : index
    %c0_19 = arith.constant 0 : index
    %79 = vector.load %arg3[%c3_18, %c0_19] : memref<4x8xf32, #tpu.memory_space<vmem>>, vector<1x8xf32>
    tpu.vector_store %arg3[%c3_18, %c0_19], %78 {strides = array<i32>} : memref<4x8xf32, #tpu.memory_space<vmem>>, vector<1x8xf32>,
    return
  }
}

</mosaic_0001>

<llo_original>
// kernel: tpu_custom_call.1
$region0: #{tpu_custom_call.1}
  #allocation0 [shape = 'u32[]', space=smem, size = 0x4, offset = 0x4, fixed_abs, tag = 'smem constant byte address 0x4 - core index']
  #allocation1 [shape = 'u32[144,128]{1,0:T(1,128)}', space=vmem, size = 0x12000, scoped, tag = 'internal scratch']
  %s0 = inlined_call_operand.hbm [shape: f32[16], index: 0, kind: input, shape index: {}]
  %s1 = inlined_call_operand.vmem [shape: f32[4], index: 1, kind: input, shape index: {}]
  %s2 = inlined_call_operand.hbm [shape: f32[4,8], index: 2, kind: input, shape index: {}]
  %s3 = inlined_call_operand.hbm [shape: f32[4,8], index: 3, kind: output, shape index: {}]
  %s4 = sld [smem:[#allocation0]]
  $region34: #{tpu_custom_call.1} parent=0
    _
  %s6 = ssub.s32 1, %s4
  %s7 = scalar_select 0, %s6, %s4
  $region1: #{tpu_custom_call.1} parent=0
    #allocation2 [shape = 'u8[512]{0}', space=smem, size = 0x200, scoped, tag = 'input window, operand 0, single buffered']
    #allocation3 [shape = 's32[1]{0}', space=sflag, size = 0x4, scoped, tag = 'scoped memory for tpu_custom_call.1']
    #allocation4 [shape = 's32[1]{0}', space=sflag, size = 0x4, scoped, tag = 'scoped memory for tpu_custom_call.1']
    #allocation5 [shape = 's32[1]{0}', space=sflag, size = 0x4, scoped, tag = 'scoped memory for tpu_custom_call.1']
    #allocation6 [shape = 's32[1]{0}', space=sflag, size = 0x4, scoped, tag = 'scoped memory for tpu_custom_call.1']
    #allocation7 [shape = 'u8[512]{0}', space=smem, size = 0x200, scoped, tag = 'input window, operand 1, single buffered']
    #allocation8 [shape = 'u8[2048]{0}', space=vmem, size = 0x800, scoped, tag = 'input window, operand 2, single buffered']
    #allocation9 [shape = 'u8[2048]{0}', space=vmem, size = 0x800, scoped, tag = 'output window, operand 0, single buffered']
    %8 = vsyncpa [#allocation5], 0
    %9 = vsyncpa [#allocation6], 0
    %10 = vsyncpa [#allocation3], 0
    %11 = vsyncpa [#allocation4], 0
    // Predicated region
    $region2: #{tpu_custom_call.1} parent=1 // pred_check
      _
    $region3: #{tpu_custom_call.1} parent=1 // pred_check_branch
      %13 = sbr.rel (0) target = $region5
    $region4: #{tpu_custom_call.1} parent=1 // pred_region
      %s15 = ssub.s32 16, 16
      %16 = vsyncadd [#allocation5], %s15
      %19 = dma.hbm_to_smem %s0, 16, [#allocation2], [#allocation5]
    $region5: #{tpu_custom_call.1} parent=1 // pred_fallthru
      _
    // Predicated region
    $region6: #{tpu_custom_call.1} parent=1 // pred_check
      _
    $region7: #{tpu_custom_call.1} parent=1 // pred_check_branch
      %21 = sbr.rel (0) target = $region9
    $region8: #{tpu_custom_call.1} parent=1 // pred_region
      %s23 = ssub.s32 16, 16
      %24 = vsyncadd [#allocation6], %s23
      %s26 = sshll.u32 %s1, 4
      %s27 = int_to_ptr.vmem [resolvable:$true] %s26
      %29 = dma.vmem_to_smem %s27, 16, [#allocation7], [#allocation6]
    $region9: #{tpu_custom_call.1} parent=1 // pred_fallthru
      _
    // Predicated region
    $region10: #{tpu_custom_call.1} parent=1 // pred_check
      _
    $region11: #{tpu_custom_call.1} parent=1 // pred_check_branch
      %31 = sbr.rel (0) target = $region13
    $region12: #{tpu_custom_call.1} parent=1 // pred_region
      %s33 = ssub.s32 64, 64
      %34 = vsyncadd [#allocation3], %s33
      %s36 = sshll.u32 [#allocation8], 4
      %s37 = int_to_ptr.vmem [resolvable:$true] %s36
      %39 = dma.hbm_to_vmem [thread:$0]  %s2, 64, %s37, [#allocation3]
    $region13: #{tpu_custom_call.1} parent=1 // pred_fallthru
      _
    // Predicated region
    $region14: #{tpu_custom_call.1} parent=1 // pred_check
      _
    $region15: #{tpu_custom_call.1} parent=1 // pred_check_branch
      %41 = sbr.rel (0) target = $region17
    $region16: #{tpu_custom_call.1} parent=1 // pred_region
      %42 = dma.done [#allocation5], 16
    $region17: #{tpu_custom_call.1} parent=1 // pred_fallthru
      _
    // Predicated region
    $region18: #{tpu_custom_call.1} parent=1 // pred_check
      _
    $region19: #{tpu_custom_call.1} parent=1 // pred_check_branch
      %44 = sbr.rel (0) target = $region21
    $region20: #{tpu_custom_call.1} parent=1 // pred_region
      %45 = dma.done [#allocation6], 16
    $region21: #{tpu_custom_call.1} parent=1 // pred_fallthru
      _
    // Predicated region
    $region22: #{tpu_custom_call.1} parent=1 // pred_check
      _
    $region23: #{tpu_custom_call.1} parent=1 // pred_check_branch
      %47 = sbr.rel (0) target = $region25
    $region24: #{tpu_custom_call.1} parent=1 // pred_region
      %48 = dma.done [#allocation3], 64
    $region25: #{tpu_custom_call.1} parent=1 // pred_fallthru
      _
    %49 = sfence
    %v50 = vld [vmem:[#allocation8] sm:$0x1]
    %v51 = vld [vmem:[#allocation8 + $0x1] sm:$0x1]
    %v52 = vld [vmem:[#allocation8 + $0x2] sm:$0x1]
    %v53 = vld [vmem:[#allocation8 + $0x3] sm:$0x1]
    %s54 = sld [smem:[#allocation2]]
    %v55 = vstv %s54
    %v56 = vmul.f32 %v50, %v55
    %s57 = sld [smem:[#allocation7]]
    %v58 = vstv %s57
    %v59 = vadd.f32 %v56, %v58
    %s60 = sld [smem:[#allocation2 + $0x1]]
    %v61 = vstv %s60
    %v62 = vmul.f32 %v51, %v61
    %v63 = vadd.f32 %v59, %v62
    %s64 = sld [smem:[#allocation2 + $0x2]]
    %v65 = vstv %s64
    %v66 = vmul.f32 %v52, %v65
    %v67 = vadd.f32 %v63, %v66
    %s68 = sld [smem:[#allocation2 + $0x3]]
    %v69 = vstv %s68
    %v70 = vmul.f32 %v53, %v69
    %v71 = vadd.f32 %v67, %v70
    %vm72 = vcmask 57344
    %73 = vst.msk [vmem:[#allocation9] sm:$0x1] %vm72, %v71
    %s74 = sld [smem:[#allocation2 + $0x4]]
    %v75 = vstv %s74
    %v76 = vmul.f32 %v50, %v75
    %s77 = sld [smem:[#allocation7 + $0x1]]
    %v78 = vstv %s77
    %v79 = vadd.f32 %v76, %v78
    %s80 = sld [smem:[#allocation2 + $0x5]]
    %v81 = vstv %s80
    %v82 = vmul.f32 %v51, %v81
    %v83 = vadd.f32 %v79, %v82
    %s84 = sld [smem:[#allocation2 + $0x6]]
    %v85 = vstv %s84
    %v86 = vmul.f32 %v52, %v85
    %v87 = vadd.f32 %v83, %v86
    %s88 = sld [smem:[#allocation2 + $0x7]]
    %v89 = vstv %s88
    %v90 = vmul.f32 %v53, %v89
    %v91 = vadd.f32 %v87, %v90
    %92 = vst.msk [vmem:[#allocation9 + $0x1] sm:$0x1] %vm72, %v91
    %s93 = sld [smem:[#allocation2 + $0x8]]
    %v94 = vstv %s93
    %v95 = vmul.f32 %v50, %v94
    %s96 = sld [smem:[#allocation7 + $0x2]]
    %v97 = vstv %s96
    %v98 = vadd.f32 %v95, %v97
    %s99 = sld [smem:[#allocation2 + $0x9]]
    %v100 = vstv %s99
    %v101 = vmul.f32 %v51, %v100
    %v102 = vadd.f32 %v98, %v101
    %s103 = sld [smem:[#allocation2 + $0xa]]
    %v104 = vstv %s103
    %v105 = vmul.f32 %v52, %v104
    %v106 = vadd.f32 %v102, %v105
    %s107 = sld [smem:[#allocation2 + $0xb]]
    %v108 = vstv %s107
    %v109 = vmul.f32 %v53, %v108
    %v110 = vadd.f32 %v106, %v109
    %111 = vst.msk [vmem:[#allocation9 + $0x2] sm:$0x1] %vm72, %v110
    %s112 = sld [smem:[#allocation2 + $0xc]]
    %v113 = vstv %s112
    %v114 = vmul.f32 %v50, %v113
    %s115 = sld [smem:[#allocation7 + $0x3]]
    %v116 = vstv %s115
    %v117 = vadd.f32 %v114, %v116
    %s118 = sld [smem:[#allocation2 + $0xd]]
    %v119 = vstv %s118
    %v120 = vmul.f32 %v51, %v119
    %v121 = vadd.f32 %v117, %v120
    %s122 = sld [smem:[#allocation2 + $0xe]]
    %v123 = vstv %s122
    %v124 = vmul.f32 %v52, %v123
    %v125 = vadd.f32 %v121, %v124
    %s126 = sld [smem:[#allocation2 + $0xf]]
    %v127 = vstv %s126
    %v128 = vmul.f32 %v53, %v127
    %v129 = vadd.f32 %v125, %v128
    %130 = vst.msk [vmem:[#allocation9 + $0x3] sm:$0x1] %vm72, %v129
    // Predicated region
    $region26: #{tpu_custom_call.1} parent=1 // pred_check
      _
    $region27: #{tpu_custom_call.1} parent=1 // pred_check_branch
      %132 = sbr.rel (0) target = $region29
    $region28: #{tpu_custom_call.1} parent=1 // pred_region
      %s134 = ssub.s32 64, 64
      %135 = vsyncadd [#allocation4], %s134
      %s137 = sshll.u32 [#allocation9], 4
      %s138 = int_to_ptr.vmem [resolvable:$true] %s137
      %140 = dma.vmem_to_hbm [thread:$0]  %s138, 64, %s3, [#allocation4]
    $region29: #{tpu_custom_call.1} parent=1 // pred_fallthru
      _
    // Predicated region
    $region30: #{tpu_custom_call.1} parent=1 // pred_check
      _
    $region31: #{tpu_custom_call.1} parent=1 // pred_check_branch
      %142 = sbr.rel (0) target = $region33
    $region32: #{tpu_custom_call.1} parent=1 // pred_region
      %143 = dma.done [#allocation4], 64
    $region33: #{tpu_custom_call.1} parent=1 // pred_fallthru
      _
    %144 = vsyncpa [#allocation3], 1
    %145 = vsyncpa [#allocation4], 1
    %146 = vsyncpa [#allocation5], 1
    %147 = vsyncpa [#allocation6], 1

</llo_original>
